<compile_context>
chip_gen: v6e
topology: v6e:2x2x1
jax: 0.10.0
libtpu: 0.0.40
codegen_flags: <defaults>
</compile_context>

<pallas_src>
import functools

import jax
import jax.numpy as jnp
from jax.experimental import pallas as pl
from jax.experimental.pallas import tpu as pltpu

LANES = 128
SUBLANES = 8
MAX_TILE_ROWS = 2048  # (2048, 128) f32 tile = 1 MiB per input


def _reduce_tile(x, tile_rows):
    # (tile_rows, 128) -> (8, 128) partial sums (tile_rows is a multiple of 8).
    return jnp.sum(x.reshape(tile_rows // SUBLANES, SUBLANES, LANES), axis=0)


def _dice_kernel_w(p_ref, t_ref, w_ref, inter_ref, card_ref, *, rows, tile_rows):
    p = p_ref[...].astype(jnp.float32)
    t = t_ref[...].astype(jnp.float32)
    w = w_ref[...].astype(jnp.float32)
    if rows % tile_rows:  # static: only trace the mask if the last tile is ragged
        i = pl.program_id(0)
        row = jax.lax.broadcasted_iota(jnp.int32, p.shape, 0)
        valid = (i * tile_rows + row) < rows
        zero = jnp.zeros_like(p)
        p = jnp.where(valid, p, zero)
        t = jnp.where(valid, t, zero)
        w = jnp.where(valid, w, zero)
    inter_ref[...] = _reduce_tile(p * t * w, tile_rows)
    card_ref[...] = _reduce_tile((p + t) * w, tile_rows)


def _dice_kernel_nw(p_ref, t_ref, inter_ref, card_ref, *, rows, tile_rows):
    p = p_ref[...].astype(jnp.float32)
    t = t_ref[...].astype(jnp.float32)
    if rows % tile_rows:
        i = pl.program_id(0)
        row = jax.lax.broadcasted_iota(jnp.int32, p.shape, 0)
        valid = (i * tile_rows + row) < rows
        zero = jnp.zeros_like(p)
        p = jnp.where(valid, p, zero)
        t = jnp.where(valid, t, zero)
    inter_ref[...] = _reduce_tile(p * t, tile_rows)
    card_ref[...] = _reduce_tile(p + t, tile_rows)


def _round_up(x, m):
    return (x + m - 1) // m * m


def sigmoid_dice_loss(inp, target, weight=None, smooth=1e-6):
    """Pallas implementation of SigmoidDiceLoss.forward. Returns a scalar."""
    p = jnp.reshape(inp, (-1,))
    t = jnp.reshape(target, (-1,))
    w = None if weight is None else jnp.reshape(weight, (-1,))

    n = p.shape[0]
    chunk = SUBLANES * LANES
    padded_n = _round_up(n, chunk)
    if padded_n != n:
        # Zero padding contributes 0 to both sums (p = t = w = 0 there).
        pad = padded_n - n
        p = jnp.pad(p, (0, pad))
        t = jnp.pad(t, (0, pad))
        if w is not None:
            w = jnp.pad(w, (0, pad))

    rows = padded_n // LANES          # multiple of 8
    tile_rows = min(MAX_TILE_ROWS, rows)
    grid = pl.cdiv(rows, tile_rows)

    inputs = [p.reshape(rows, LANES), t.reshape(rows, LANES)]
    if w is not None:
        inputs.append(w.reshape(rows, LANES))

    in_spec = pl.BlockSpec((tile_rows, LANES), lambda i: (i, 0))
    out_spec = pl.BlockSpec((SUBLANES, LANES), lambda i: (i, 0))
    out_shape = jax.ShapeDtypeStruct((grid * SUBLANES, LANES), jnp.float32)

    kernel = _dice_kernel_w if w is not None else _dice_kernel_nw
    kernel = functools.partial(kernel, rows=rows, tile_rows=tile_rows)

    inter_p, card_p = pl.pallas_call(
        kernel,
        out_shape=(out_shape, out_shape),
        grid_spec=pltpu.PrefetchScalarGridSpec(
            num_scalar_prefetch=0,
            grid=(grid,),
            in_specs=[in_spec] * len(inputs),
            out_specs=(out_spec, out_spec),
        ),
        compiler_params=pltpu.CompilerParams(
            dimension_semantics=("parallel",),
        ),
    )(*inputs)

    # Tiny epilogue in plain JAX (keeps smooth out of the kernel).
    inter = jnp.sum(inter_p)
    card = jnp.sum(card_p)
    s = jnp.float32(smooth)
    return 1.0 - (2.0 * inter + s) / (card + s)


def _reference(inp, target, weight=None, smooth=1e-6):
    p = jnp.reshape(inp, (-1,)).astype(jnp.float32)
    t = jnp.reshape(target, (-1,)).astype(jnp.float32)
    w = 1.0 if weight is None else jnp.reshape(weight, (-1,)).astype(jnp.float32)
    inter = jnp.sum(p * t * w)
    card = jnp.sum((p + t) * w)
    return 1.0 - (2.0 * inter + smooth) / (card + smooth)


if __name__ == "__main__":
    key = jax.random.PRNGKey(0)
    k1, k2, k3 = jax.random.split(key, 3)

    N, X, Y, Z = 2, 4, 16, 16
    logits = jax.random.normal(k1, (N, X, Y, Z), dtype=jnp.float32)
    inp = jax.nn.sigmoid(logits)                                   # sigmoid output
    target = (jax.random.uniform(k2, (N, X, Y, Z)) > 0.5).astype(jnp.float32)
    weight = jax.random.uniform(k3, (N, X, Y, Z), dtype=jnp.float32)

    # No-weight path (2-input specialized kernel)
    loss = sigmoid_dice_loss(inp, target)
    jax.block_until_ready(loss)
    ref = _reference(inp, target)

    # Weighted path (3-input kernel)
    loss_w = sigmoid_dice_loss(inp, target, weight)
    jax.block_until_ready(loss_w)
    ref_w = _reference(inp, target, weight)

    assert jnp.allclose(loss, ref, rtol=1e-5, atol=1e-6), (loss, ref)
    assert jnp.allclose(loss_w, ref_w, rtol=1e-5, atol=1e-6), (loss_w, ref_w)

    print("KERNEL_OK")
</pallas_src>

<mosaic_0001>
module attributes {stable_mosaic.version = 11 : i64} {
  func.func @_dice_kernel_nw(%arg0: i32, %arg1: memref<16x128xf32, #tpu.memory_space<vmem>>, %arg2: memref<16x128xf32, #tpu.memory_space<vmem>>, %arg3: memref<8x128xf32, #tpu.memory_space<vmem>>, %arg4: memref<8x128xf32, #tpu.memory_space<vmem>>) attributes {dimension_semantics = [#tpu.dimension_semantics<parallel>], iteration_bounds = array<i64: 1>, scalar_prefetch = 0 : i64, scratch_operands = 0 : i64, tpu.core_type = #tpu.core_type<tc>, window_params = [{transform_indices = @transform_0, window_bounds = array<i64: 16, 128>}, {transform_indices = @transform_1, window_bounds = array<i64: 16, 128>}, {transform_indices = @transform_2, window_bounds = array<i64: 8, 128>}, {transform_indices = @transform_3, window_bounds = array<i64: 8, 128>}]} {
    %c0 = arith.constant 0 : index
    %c0_0 = arith.constant 0 : index
    %0 = vector.load %arg1[%c0, %c0_0] : memref<16x128xf32, #tpu.memory_space<vmem>>, vector<16x128xf32>
    %c0_1 = arith.constant 0 : index
    %c0_2 = arith.constant 0 : index
    %1 = vector.load %arg2[%c0_1, %c0_2] : memref<16x128xf32, #tpu.memory_space<vmem>>, vector<16x128xf32>
    %2 = arith.mulf %0, %1 : vector<16x128xf32>
    %3 = vector.shape_cast %2 : vector<16x128xf32> to vector<2x8x128xf32>
    %cst = arith.constant dense<0.000000e+00> : vector<8x128xf32>
    %4 = vector.multi_reduction <add>, %3, %cst [0] : vector<2x8x128xf32> to vector<8x128xf32>
    %c0_3 = arith.constant 0 : index
    %c0_4 = arith.constant 0 : index
    %5 = vector.load %arg3[%c0_3, %c0_4] : memref<8x128xf32, #tpu.memory_space<vmem>>, vector<8x128xf32>
    tpu.vector_store %arg3[%c0_3, %c0_4], %4 {strides = array<i32>} : memref<8x128xf32, #tpu.memory_space<vmem>>, vector<8x128xf32>,
    %6 = arith.addf %0, %1 : vector<16x128xf32>
    %7 = vector.shape_cast %6 : vector<16x128xf32> to vector<2x8x128xf32>
    %cst_5 = arith.constant dense<0.000000e+00> : vector<8x128xf32>
    %8 = vector.multi_reduction <add>, %7, %cst_5 [0] : vector<2x8x128xf32> to vector<8x128xf32>
    %c0_6 = arith.constant 0 : index
    %c0_7 = arith.constant 0 : index
    %9 = vector.load %arg4[%c0_6, %c0_7] : memref<8x128xf32, #tpu.memory_space<vmem>>, vector<8x128xf32>
    tpu.vector_store %arg4[%c0_6, %c0_7], %8 {strides = array<i32>} : memref<8x128xf32, #tpu.memory_space<vmem>>, vector<8x128xf32>,
    return
  }
  func.func @transform_0(%arg0: i32) -> (i32, i32) {
    %c0_i32 = arith.constant 0 : i32
    %c0_i32_0 = arith.constant 0 : i32
    return %arg0, %c0_i32 : i32, i32
  }
  func.func @transform_1(%arg0: i32) -> (i32, i32) {
    %c0_i32 = arith.constant 0 : i32
    %c0_i32_0 = arith.constant 0 : i32
    return %arg0, %c0_i32 : i32, i32
  }
  func.func @transform_2(%arg0: i32) -> (i32, i32) {
    %c0_i32 = arith.constant 0 : i32
    %c0_i32_0 = arith.constant 0 : i32
    return %arg0, %c0_i32 : i32, i32
  }
  func.func @transform_3(%arg0: i32) -> (i32, i32) {
    %c0_i32 = arith.constant 0 : i32
    %c0_i32_0 = arith.constant 0 : i32
    return %arg0, %c0_i32 : i32, i32
  }
}

</mosaic_0001>

<llo_original>
// kernel: tpu_custom_call.1
$region0: #{tpu_custom_call.1}
  #allocation0 [shape = 'u32[]', space=smem, size = 0x4, offset = 0x4, fixed_abs, tag = 'smem constant byte address 0x4 - core index']
  #allocation1 [shape = 'u32[144,128]{1,0:T(1,128)}', space=vmem, size = 0x12000, scoped, tag = 'internal scratch']
  %s0 = inlined_call_operand.hbm [shape: f32[16,128], index: 0, kind: input, shape index: {}]
  %s1 = inlined_call_operand.hbm [shape: f32[16,128], index: 1, kind: input, shape index: {}]
  %s2 = inlined_call_operand.hbm [shape: f32[8,128], index: 2, kind: output, shape index: {0}]
  %s3 = inlined_call_operand.hbm [shape: f32[8,128], index: 3, kind: output, shape index: {1}]
  %4 = xla_tuple %s2, %s3
  %s5 = sld [smem:[#allocation0]]
  $region34: #{tpu_custom_call.1} parent=0
    _
  %s7 = ssub.s32 1, %s5
  %s8 = scalar_select 0, %s7, %s5
  $region1: #{tpu_custom_call.1} parent=0
    #allocation2 [shape = 'u8[8192]{0}', space=vmem, size = 0x2000, scoped, tag = 'input window, operand 0, single buffered']
    #allocation3 [shape = 's32[1]{0}', space=sflag, size = 0x4, scoped, tag = 'scoped memory for tpu_custom_call.1']
    #allocation4 [shape = 's32[1]{0}', space=sflag, size = 0x4, scoped, tag = 'scoped memory for tpu_custom_call.1']
    #allocation5 [shape = 'u8[8192]{0}', space=vmem, size = 0x2000, scoped, tag = 'input window, operand 1, single buffered']
    #allocation6 [shape = 's32[1]{0}', space=sflag, size = 0x4, scoped, tag = 'scoped memory for tpu_custom_call.1']
    #allocation7 [shape = 'u8[4096]{0}', space=vmem, size = 0x1000, scoped, tag = 'output window, operand 0, single buffered']
    #allocation8 [shape = 'u8[4096]{0}', space=vmem, size = 0x1000, scoped, tag = 'output window, operand 1, single buffered']
    #allocation9 [shape = 's32[1]{0}', space=sflag, size = 0x4, scoped, tag = 'scoped memory for tpu_custom_call.1']
    %9 = vsyncpa [#allocation3], 0
    %10 = vsyncpa [#allocation6], 0
    %11 = vsyncpa [#allocation4], 0
    %12 = vsyncpa [#allocation9], 0
    // Predicated region
    $region2: #{tpu_custom_call.1} parent=1 // pred_check
      _
    $region3: #{tpu_custom_call.1} parent=1 // pred_check_branch
      %14 = sbr.rel (0) target = $region5
    $region4: #{tpu_custom_call.1} parent=1 // pred_region
      %s16 = ssub.s32 256, 256
      %17 = vsyncadd [#allocation3], %s16
      %s18 = sshll.u32 [#allocation2], 4
      %s19 = int_to_ptr.vmem [resolvable:$true] %s18
      %24 = dma.hbm_to_vmem [thread:$0]  %s0, 256, %s19, [#allocation3], 128, 128, 8
    $region5: #{tpu_custom_call.1} parent=1 // pred_fallthru
      _
    // Predicated region
    $region6: #{tpu_custom_call.1} parent=1 // pred_check
      _
    $region7: #{tpu_custom_call.1} parent=1 // pred_check_branch
      %26 = sbr.rel (0) target = $region9
    $region8: #{tpu_custom_call.1} parent=1 // pred_region
      %s28 = ssub.s32 256, 256
      %29 = vsyncadd [#allocation6], %s28
      %s30 = sshll.u32 [#allocation5], 4
      %s31 = int_to_ptr.vmem [resolvable:$true] %s30
      %36 = dma.hbm_to_vmem [thread:$0]  %s1, 256, %s31, [#allocation6], 128, 128, 8
    $region9: #{tpu_custom_call.1} parent=1 // pred_fallthru
      _
    // Predicated region
    $region10: #{tpu_custom_call.1} parent=1 // pred_check
      _
    $region11: #{tpu_custom_call.1} parent=1 // pred_check_branch
      %38 = sbr.rel (0) target = $region13
    $region12: #{tpu_custom_call.1} parent=1 // pred_region
      %39 = dma.done [#allocation3], 256
    $region13: #{tpu_custom_call.1} parent=1 // pred_fallthru
      _
    // Predicated region
    $region14: #{tpu_custom_call.1} parent=1 // pred_check
      _
    $region15: #{tpu_custom_call.1} parent=1 // pred_check_branch
      %41 = sbr.rel (0) target = $region17
    $region16: #{tpu_custom_call.1} parent=1 // pred_region
      %42 = dma.done [#allocation6], 256
    $region17: #{tpu_custom_call.1} parent=1 // pred_fallthru
      _
    %v43 = vld [vmem:[#allocation2] sm:$0xff]
    %v44 = vld [vmem:[#allocation2 + $0x8] sm:$0xff]
    %v45 = vld [vmem:[#allocation5] sm:$0xff]
    %v46 = vld [vmem:[#allocation5 + $0x8] sm:$0xff]
    %v47 = vmul.f32 %v43, %v45
    %v48 = vmul.f32 %v44, %v46
    %v49 = vadd.f32 %v47, %v48
    %50 = vst [vmem:[#allocation7] sm:$0xff] %v49
    %v51 = vadd.f32 %v43, %v45
    %v52 = vadd.f32 %v44, %v46
    %v53 = vadd.f32 %v51, %v52
    %54 = vst [vmem:[#allocation8] sm:$0xff] %v53
    // Predicated region
    $region18: #{tpu_custom_call.1} parent=1 // pred_check
      _
    $region19: #{tpu_custom_call.1} parent=1 // pred_check_branch
      %56 = sbr.rel (0) target = $region21
    $region20: #{tpu_custom_call.1} parent=1 // pred_region
      %s58 = ssub.s32 128, 128
      %59 = vsyncadd [#allocation4], %s58
      %s61 = sshll.u32 [#allocation7], 4
      %s62 = int_to_ptr.vmem [resolvable:$true] %s61
      %64 = dma.vmem_to_hbm [thread:$0]  %s62, 128, %s2, [#allocation4]
    $region21: #{tpu_custom_call.1} parent=1 // pred_fallthru
      _
    // Predicated region
    $region22: #{tpu_custom_call.1} parent=1 // pred_check
      _
    $region23: #{tpu_custom_call.1} parent=1 // pred_check_branch
      %66 = sbr.rel (0) target = $region25
    $region24: #{tpu_custom_call.1} parent=1 // pred_region
      %s68 = ssub.s32 128, 128
      %69 = vsyncadd [#allocation9], %s68
      %s71 = sshll.u32 [#allocation8], 4
      %s72 = int_to_ptr.vmem [resolvable:$true] %s71
      %74 = dma.vmem_to_hbm [thread:$0]  %s72, 128, %s3, [#allocation9]
    $region25: #{tpu_custom_call.1} parent=1 // pred_fallthru
      _
    // Predicated region
    $region26: #{tpu_custom_call.1} parent=1 // pred_check
      _
    $region27: #{tpu_custom_call.1} parent=1 // pred_check_branch
      %76 = sbr.rel (0) target = $region29
    $region28: #{tpu_custom_call.1} parent=1 // pred_region
      %77 = dma.done [#allocation4], 128
    $region29: #{tpu_custom_call.1} parent=1 // pred_fallthru
      _
    // Predicated region
    $region30: #{tpu_custom_call.1} parent=1 // pred_check
      _
    $region31: #{tpu_custom_call.1} parent=1 // pred_check_branch
      %79 = sbr.rel (0) target = $region33
    $region32: #{tpu_custom_call.1} parent=1 // pred_region
      %80 = dma.done [#allocation9], 128
    $region33: #{tpu_custom_call.1} parent=1 // pred_fallthru
      _
    %81 = vsyncpa [#allocation3], 1
    %82 = vsyncpa [#allocation6], 1
    %83 = vsyncpa [#allocation4], 1
    %84 = vsyncpa [#allocation9], 1

</llo_original>
